<compile_context>
chip_gen: v7x
topology: tpu7x:2x2x1
jax: 0.10.0
libtpu: 0.0.40
codegen_flags: <defaults>
</compile_context>

<pallas_src>
import jax
import jax.numpy as jnp
from jax.experimental import pallas as pl
from jax.experimental.pallas import tpu as pltpu

LANE = 128     # vreg lane width (last dim)
SUBLANE = 8    # vreg sublane height (second-to-last dim)


def _round_up(n, m):
    return ((n + m - 1) // m) * m


def _pick_batch_tile(B, requested=None, target=256):
    """Sublane-aligned batch tile: ~target rows, >=2 parallel grid steps when
    possible (v7x has 2 TensorCores), preferring tiles that divide the padded
    batch exactly (zero wasted rows / MXU FLOPs)."""
    b_sub = _round_up(max(B, 1), SUBLANE)
    if requested is not None:
        return max(SUBLANE, min(_round_up(requested, SUBLANE), b_sub))
    if b_sub <= SUBLANE:
        return SUBLANE
    cap = max(SUBLANE, min(target, _round_up(b_sub // 2, SUBLANE)))
    floor = SUBLANE if cap <= 64 else 64
    cands = list(range(cap, floor - 1, -SUBLANE))
    # key = (padded-row waste, prefer larger tile)
    return min(cands, key=lambda c: (pl.cdiv(b_sub, c) * c - b_sub, -c))


def _pick_k_tile(H_pad, M_pad, *, resident_budget=16 << 20, chunk_budget=4 << 20):
    """fc1 reduction (K = H) tile: keep W1^T whole when it is small, otherwise
    stream (k_tile, M_pad) bf16 chunks of ~chunk_budget bytes (double-buffered)."""
    if 2 * H_pad * M_pad <= resident_budget:
        return H_pad
    target = max(LANE, (chunk_budget // max(1, 2 * M_pad)) // LANE * LANE)
    for cand in range(min(target, H_pad), LANE - 1, -LANE):
        if H_pad % cand == 0:
            return cand
    return LANE


def _vmem_bytes_estimate(batch_tile, h_tile, M_pad, O_pad,
                         x_itemsize, out_itemsize, k_steps):
    w1 = (2 if k_steps > 1 else 1) * h_tile * M_pad * 2   # bf16 W1^T chunk(s)
    w2 = M_pad * O_pad * 2                                # bf16 W2^T (single buffer)
    biases = (M_pad + O_pad) * 4                          # f32, single buffer
    x_tiles = 2 * batch_tile * h_tile * x_itemsize        # double-buffered input
    out_tiles = 2 * batch_tile * O_pad * out_itemsize     # double-buffered output
    acc = batch_tile * M_pad * 4                          # f32 accumulator scratch
    tmps = batch_tile * (M_pad + 3 * O_pad) * 4           # h / logits / e temporaries
    return w1 + w2 + biases + x_tiles + out_tiles + acc + tmps


def _pick_vmem_limit(required_bytes):
    """Scale the scoped-VMEM limit with the real requirement; cap well below
    physical VMEM (v7x: 64 MiB/TC) so the pipeliner keeps headroom."""
    cap = 48 << 20  # safe fallback on every generation
    try:
        info = pltpu.get_tpu_info()
        cap = int(getattr(info, "vmem_capacity_bytes", 64 << 20) * 3 // 4)
    except Exception:
        pass
    return int(min(cap, max(32 << 20, 2 * required_bytes + (4 << 20))))


def mlp_kernel(x_ref, w1_ref, b1_ref, w2_ref, b2_ref, o_ref, h_acc):
    k = pl.program_id(1)

    @pl.when(k == 0)
    def _():
        h_acc[...] = jnp.zeros_like(h_acc)

    # fc1 partial product: bf16 MXU matmul, f32 accumulation in VMEM scratch.
    x = x_ref[...].astype(w1_ref.dtype)
    h_acc[...] += jnp.dot(x, w1_ref[...], preferred_element_type=jnp.float32)

    @pl.when(k == pl.num_programs(1) - 1)
    def _():
        # bias + relu in f32 (VPU); fc2 in bf16 on the MXU, f32 accumulation.
        h = jnp.maximum(h_acc[...] + b1_ref[...], 0.0)
        logits = jnp.dot(h.astype(w2_ref.dtype), w2_ref[...],
                         preferred_element_type=jnp.float32) + b2_ref[...]
        # Padded output lanes carry a -1e30 bias (set once in prepare_params),
        # so they exp() to 0 — no iota/compare/select needed here.
        m = jnp.max(logits, axis=-1, keepdims=True)
        e = jnp.exp(logits - m)
        denom = jnp.sum(e, axis=-1, keepdims=True)
        # EUP approximate reciprocal instead of a VALU divide.
        o_ref[...] = (e * pl.reciprocal(denom, approx=True)).astype(o_ref.dtype)


def prepare_params(w1, b1, w2, b2, *, mxu_dtype=jnp.bfloat16):
    """One-time weight preparation (transpose + pad + cast), hoisted off the
    per-call path.  PyTorch layout in: w1 [M,H], b1 [M], w2 [O,M], b2 [O]."""
    M, H = w1.shape
    O = w2.shape[0]
    H_pad, M_pad, O_pad = _round_up(H, LANE), _round_up(M, LANE), _round_up(O, LANE)

    w1_t = jnp.zeros((H_pad, M_pad), mxu_dtype).at[:H, :M].set(w1.T.astype(mxu_dtype))
    w2_t = jnp.zeros((M_pad, O_pad), mxu_dtype).at[:M, :O].set(w2.T.astype(mxu_dtype))
    b1_p = jnp.zeros((1, M_pad), jnp.float32).at[0, :M].set(b1.astype(jnp.float32))
    # Padded logit lanes get a large *finite* negative bias (not -inf, to avoid
    # inf-inf NaNs in the max-subtract) so softmax ignores them exactly.
    b2_p = jnp.full((1, O_pad), -1e30, jnp.float32).at[0, :O].set(
        b2.astype(jnp.float32))
    return dict(w1_t=w1_t, b1=b1_p, w2_t=w2_t, b2=b2_p, H=H, M=M, O=O)


def mlp_forward(x, params, *, batch_tile=None, out_dtype=jnp.float32,
                vmem_limit_bytes=None):
    """x: [B, H] f32. params: output of prepare_params.
    Returns softmax(fc2(relu(fc1(x)))) as [B, O] in out_dtype (f32 default;
    pass bf16 to halve writeback DMA if downstream accepts it)."""
    B, H = x.shape
    assert H == params["H"], "input feature dim does not match prepared params"
    w1_t, b1_p, w2_t, b2_p = params["w1_t"], params["b1"], params["w2_t"], params["b2"]
    H_pad, M_pad = w1_t.shape
    O_pad = w2_t.shape[1]
    O = params["O"]

    batch_tile = _pick_batch_tile(B, batch_tile)
    B_pad = _round_up(B, batch_tile)
    h_tile = _pick_k_tile(H_pad, M_pad)
    k_steps = H_pad // h_tile

    if (B_pad, H_pad) == (B, H):
        # Already tile-aligned: stream x as-is and cast to bf16 in-kernel,
        # skipping an extra full HBM pad/copy pass over the streamed operand.
        x_p = x
    else:
        x_p = jnp.zeros((B_pad, H_pad), jnp.bfloat16).at[:B, :H].set(
            x.astype(jnp.bfloat16))

    out_itemsize = jnp.dtype(out_dtype).itemsize
    if vmem_limit_bytes is None:
        need = _vmem_bytes_estimate(batch_tile, h_tile, M_pad, O_pad,
                                    x_p.dtype.itemsize, out_itemsize, k_steps)
        vmem_limit_bytes = _pick_vmem_limit(need)

    flops = 2 * B_pad * (H_pad * M_pad + M_pad * O_pad)
    bytes_accessed = (x_p.size * x_p.dtype.itemsize
                      + w1_t.size * w1_t.dtype.itemsize
                      + w2_t.size * w2_t.dtype.itemsize
                      + b1_p.size * 4 + b2_p.size * 4
                      + B_pad * O_pad * out_itemsize)
    cost = pl.CostEstimate(flops=flops,
                           transcendentals=B_pad * (O_pad + 1),
                           bytes_accessed=bytes_accessed)

    single = pl.Buffered(1)  # constant-index blocks: fetched once, no double buffer
    w1_kwargs = {"pipeline_mode": single} if k_steps == 1 else {}

    grid_spec = pltpu.PrefetchScalarGridSpec(
        num_scalar_prefetch=0,
        grid=(B_pad // batch_tile, k_steps),
        in_specs=[
            pl.BlockSpec((batch_tile, h_tile), lambda i, k: (i, k)),            # x tile
            pl.BlockSpec((h_tile, M_pad), lambda i, k: (k, 0), **w1_kwargs),    # W1^T
            pl.BlockSpec((1, M_pad), lambda i, k: (0, 0), pipeline_mode=single),    # b1
            pl.BlockSpec((M_pad, O_pad), lambda i, k: (0, 0), pipeline_mode=single),  # W2^T
            pl.BlockSpec((1, O_pad), lambda i, k: (0, 0), pipeline_mode=single),    # b2
        ],
        out_specs=pl.BlockSpec((batch_tile, O_pad), lambda i, k: (i, 0)),
        scratch_shapes=[pltpu.VMEM((batch_tile, M_pad), jnp.float32)],
    )

    out_padded = pl.pallas_call(
        mlp_kernel,
        out_shape=jax.ShapeDtypeStruct((B_pad, O_pad), out_dtype),
        grid_spec=grid_spec,
        compiler_params=pltpu.CompilerParams(
            dimension_semantics=("parallel", "arbitrary"),
            vmem_limit_bytes=int(vmem_limit_bytes),
        ),
        cost_estimate=cost,
    )(x_p, w1_t, b1_p, w2_t, b2_p)

    return out_padded[:B, :O]


def init_params(key, hidden_size, mid_size, out_size):
    """PyTorch-style nn.Linear init: Uniform(-1/sqrt(fan_in), 1/sqrt(fan_in)).
    fc1.weight: [mid, hidden], fc1.bias: [mid]
    fc2.weight: [out, mid],    fc2.bias: [out]"""
    k1, k2, k3, k4 = jax.random.split(key, 4)
    lim1 = 1.0 / jnp.sqrt(hidden_size)
    lim2 = 1.0 / jnp.sqrt(mid_size)
    w1 = jax.random.uniform(k1, (mid_size, hidden_size), jnp.float32, -lim1, lim1)
    b1 = jax.random.uniform(k2, (mid_size,), jnp.float32, -lim1, lim1)
    w2 = jax.random.uniform(k3, (out_size, mid_size), jnp.float32, -lim2, lim2)
    b2 = jax.random.uniform(k4, (out_size,), jnp.float32, -lim2, lim2)
    return w1, b1, w2, b2


if __name__ == "__main__":
    # Small shapes consistent with the module's Linear layers.
    batch, hidden_size, mid_size, out_size = 8, 32, 64, 16

    key = jax.random.PRNGKey(0)
    kx, kp = jax.random.split(key)
    x = jax.random.normal(kx, (batch, hidden_size), jnp.float32)
    w1, b1, w2, b2 = init_params(kp, hidden_size, mid_size, out_size)

    # One-time weight prep (transpose / pad / bf16 cast) off the hot path.
    params = prepare_params(w1, b1, w2, b2)

    out = mlp_forward(x, params)
    out = jax.block_until_ready(out)
    assert out.shape == (batch, out_size)

    # Reference in plain JAX, applying the same bf16 quantization of the MXU
    # operands that the kernel uses (accumulation / bias / relu / softmax in f32).
    xq = x.astype(jnp.bfloat16).astype(jnp.float32)
    w1q = w1.astype(jnp.bfloat16).astype(jnp.float32)
    w2q = w2.astype(jnp.bfloat16).astype(jnp.float32)
    h_ref = jnp.maximum(xq @ w1q.T + b1, 0.0)
    hq = h_ref.astype(jnp.bfloat16).astype(jnp.float32)
    logits_ref = hq @ w2q.T + b2
    ref = jax.nn.softmax(logits_ref, axis=-1)

    assert jnp.allclose(out, ref, atol=1e-2, rtol=1e-2), "mismatch vs reference"
    print("KERNEL_OK")
</pallas_src>

<mosaic_0001>
module attributes {stable_mosaic.version = 11 : i64} {
  func.func @mlp_kernel(%arg0: i32, %arg1: i32, %arg2: memref<8x128xbf16, #tpu.memory_space<vmem>>, %arg3: memref<128x128xbf16, #tpu.memory_space<vmem>>, %arg4: memref<1x128xf32, #tpu.memory_space<vmem>>, %arg5: memref<128x128xbf16, #tpu.memory_space<vmem>>, %arg6: memref<1x128xf32, #tpu.memory_space<vmem>>, %arg7: memref<8x128xf32, #tpu.memory_space<vmem>>, %arg8: memref<8x128xf32, #tpu.memory_space<vmem>>) attributes {dimension_semantics = [#tpu.dimension_semantics<parallel>, #tpu.dimension_semantics<arbitrary>], iteration_bounds = array<i64: 1, 1>, scalar_prefetch = 0 : i64, scratch_operands = 1 : i64, tpu.core_type = #tpu.core_type<tc>, window_params = [{transform_indices = @transform_0, window_bounds = array<i64: 8, 128>}, {pipeline_mode = #tpu.pipeline_mode<synchronous>, transform_indices = @transform_1, window_bounds = array<i64: 128, 128>}, {pipeline_mode = #tpu.pipeline_mode<synchronous>, transform_indices = @transform_2, window_bounds = array<i64: 1, 128>}, {pipeline_mode = #tpu.pipeline_mode<synchronous>, transform_indices = @transform_3, window_bounds = array<i64: 128, 128>}, {pipeline_mode = #tpu.pipeline_mode<synchronous>, transform_indices = @transform_4, window_bounds = array<i64: 1, 128>}, {transform_indices = @transform_5, window_bounds = array<i64: 8, 128>}]} {
    %c0_i32 = arith.constant 0 : i32
    %0 = arith.cmpi eq, %arg1, %c0_i32 : i32
    %1 = arith.extui %0 : i1 to i32
    %c0_i32_0 = arith.constant 0 : i32
    %2 = arith.cmpi ne, %1, %c0_i32_0 : i32
    scf.if %2 {
      %cst_10 = arith.constant 0.000000e+00 : f32
      %12 = vector.broadcast %cst_10 : f32 to vector<8x128xf32>
      %c0_11 = arith.constant 0 : index
      %c0_12 = arith.constant 0 : index
      %13 = vector.load %arg8[%c0_11, %c0_12] : memref<8x128xf32, #tpu.memory_space<vmem>>, vector<8x128xf32>
      tpu.vector_store %arg8[%c0_11, %c0_12], %12 {strides = array<i32>} : memref<8x128xf32, #tpu.memory_space<vmem>>, vector<8x128xf32>,
    } else {
    }
    %c0 = arith.constant 0 : index
    %c0_1 = arith.constant 0 : index
    %3 = vector.load %arg2[%c0, %c0_1] : memref<8x128xbf16, #tpu.memory_space<vmem>>, vector<8x128xbf16>
    %c0_2 = arith.constant 0 : index
    %c0_3 = arith.constant 0 : index
    %4 = vector.load %arg8[%c0_2, %c0_3] : memref<8x128xf32, #tpu.memory_space<vmem>>, vector<8x128xf32>
    %c0_4 = arith.constant 0 : index
    %c0_5 = arith.constant 0 : index
    %5 = vector.load %arg3[%c0_4, %c0_5] : memref<128x128xbf16, #tpu.memory_space<vmem>>, vector<128x128xbf16>
    %cst = arith.constant dense<0.000000e+00> : vector<8x128xf32>
    %6 = tpu.matmul %3, %5, %cst {dimension_numbers = #tpu.dot_dimension_numbers<[1], [0], [0], [1], [0, 0, 1, 1], [], []>} : vector<8x128xbf16>, vector<128x128xbf16>, vector<8x128xf32> -> vector<8x128xf32>
    %7 = arith.addf %4, %6 : vector<8x128xf32>
    %c0_6 = arith.constant 0 : index
    %c0_7 = arith.constant 0 : index
    %8 = vector.load %arg8[%c0_6, %c0_7] : memref<8x128xf32, #tpu.memory_space<vmem>>, vector<8x128xf32>
    tpu.vector_store %arg8[%c0_6, %c0_7], %7 {strides = array<i32>} : memref<8x128xf32, #tpu.memory_space<vmem>>, vector<8x128xf32>,
    %c0_i32_8 = arith.constant 0 : i32
    %9 = arith.cmpi eq, %arg1, %c0_i32_8 : i32
    %10 = arith.extui %9 : i1 to i32
    %c0_i32_9 = arith.constant 0 : i32
    %11 = arith.cmpi ne, %10, %c0_i32_9 : i32
    scf.if %11 {
      %c0_10 = arith.constant 0 : index
      %c0_11 = arith.constant 0 : index
      %12 = vector.load %arg8[%c0_10, %c0_11] : memref<8x128xf32, #tpu.memory_space<vmem>>, vector<8x128xf32>
      %c0_12 = arith.constant 0 : index
      %c0_13 = arith.constant 0 : index
      %13 = vector.load %arg4[%c0_12, %c0_13] : memref<1x128xf32, #tpu.memory_space<vmem>>, vector<1x128xf32>
      %14 = vector.broadcast %13 : vector<1x128xf32> to vector<8x128xf32>
      %15 = arith.addf %12, %14 : vector<8x128xf32>
      %cst_14 = arith.constant 0.000000e+00 : f32
      %16 = vector.broadcast %cst_14 : f32 to vector<8x128xf32>
      %17 = arith.maximumf %15, %16 : vector<8x128xf32>
      %18 = arith.truncf %17 : vector<8x128xf32> to vector<8x128xbf16>
      %c0_15 = arith.constant 0 : index
      %c0_16 = arith.constant 0 : index
      %19 = vector.load %arg5[%c0_15, %c0_16] : memref<128x128xbf16, #tpu.memory_space<vmem>>, vector<128x128xbf16>
      %cst_17 = arith.constant dense<0.000000e+00> : vector<8x128xf32>
      %20 = tpu.matmul %18, %19, %cst_17 {dimension_numbers = #tpu.dot_dimension_numbers<[1], [0], [0], [1], [0, 0, 1, 1], [], []>} : vector<8x128xbf16>, vector<128x128xbf16>, vector<8x128xf32> -> vector<8x128xf32>
      %c0_18 = arith.constant 0 : index
      %c0_19 = arith.constant 0 : index
      %21 = vector.load %arg6[%c0_18, %c0_19] : memref<1x128xf32, #tpu.memory_space<vmem>>, vector<1x128xf32>
      %22 = vector.broadcast %21 : vector<1x128xf32> to vector<8x128xf32>
      %23 = arith.addf %20, %22 : vector<8x128xf32>
      %cst_20 = arith.constant dense<0xFF800000> : vector<8xf32>
      %24 = vector.multi_reduction <maximumf>, %23, %cst_20 [1] : vector<8x128xf32> to vector<8xf32>
      %25 = vector.shape_cast %24 : vector<8xf32> to vector<8x1xf32>
      %26 = vector.broadcast %25 : vector<8x1xf32> to vector<8x128xf32>
      %27 = arith.subf %23, %26 : vector<8x128xf32>
      %28 = math.exp %27 : vector<8x128xf32>
      %cst_21 = arith.constant dense<0.000000e+00> : vector<8xf32>
      %29 = vector.multi_reduction <add>, %28, %cst_21 [1] : vector<8x128xf32> to vector<8xf32>
      %30 = vector.shape_cast %29 : vector<8xf32> to vector<8x1xf32>
      %31 = tpu.reciprocal %30 {approx = true} : vector<8x1xf32> -> vector<8x1xf32>
      %32 = vector.broadcast %31 : vector<8x1xf32> to vector<8x128xf32>
      %33 = arith.mulf %28, %32 : vector<8x128xf32>
      %c0_22 = arith.constant 0 : index
      %c0_23 = arith.constant 0 : index
      %34 = vector.load %arg7[%c0_22, %c0_23] : memref<8x128xf32, #tpu.memory_space<vmem>>, vector<8x128xf32>
      tpu.vector_store %arg7[%c0_22, %c0_23], %33 {strides = array<i32>} : memref<8x128xf32, #tpu.memory_space<vmem>>, vector<8x128xf32>,
    } else {
    }
    return
  }
  func.func @transform_0(%arg0: i32, %arg1: i32) -> (i32, i32) {
    %c0_i32 = arith.constant 0 : i32
    return %arg0, %arg1 : i32, i32
  }
  func.func @transform_1(%arg0: i32, %arg1: i32) -> (i32, i32) {
    %c0_i32 = arith.constant 0 : i32
    %c0_i32_0 = arith.constant 0 : i32
    return %arg1, %c0_i32 : i32, i32
  }
  func.func @transform_2(%arg0: i32, %arg1: i32) -> (i32, i32) {
    %c0_i32 = arith.constant 0 : i32
    %c0_i32_0 = arith.constant 0 : i32
    %c0_i32_1 = arith.constant 0 : i32
    return %c0_i32, %c0_i32_0 : i32, i32
  }
  func.func @transform_3(%arg0: i32, %arg1: i32) -> (i32, i32) {
    %c0_i32 = arith.constant 0 : i32
    %c0_i32_0 = arith.constant 0 : i32
    %c0_i32_1 = arith.constant 0 : i32
    return %c0_i32, %c0_i32_0 : i32, i32
  }
  func.func @transform_4(%arg0: i32, %arg1: i32) -> (i32, i32) {
    %c0_i32 = arith.constant 0 : i32
    %c0_i32_0 = arith.constant 0 : i32
    %c0_i32_1 = arith.constant 0 : i32
    return %c0_i32, %c0_i32_0 : i32, i32
  }
  func.func @transform_5(%arg0: i32, %arg1: i32) -> (i32, i32) {
    %c0_i32 = arith.constant 0 : i32
    %c0_i32_0 = arith.constant 0 : i32
    return %arg0, %c0_i32 : i32, i32
  }
}

</mosaic_0001>

<llo_original>
// kernel: tpu_custom_call.1
$region0: #{tpu_custom_call.1}
  #allocation0 [shape = 'u32[]', space=smem, size = 0x4, offset = 0x4, fixed_abs, tag = 'smem constant byte address 0x4 - core index']
  #allocation1 [shape = 'u32[144,128]{1,0:T(1,128)}', space=vmem, size = 0x12000, scoped, tag = 'internal scratch']
  #allocation2 [shape = 'f32[8,128]{1,0:T(8,128)}', space=vmem, size = 0x1000, scoped, tag = 'scratch operand']
  %s0 = inlined_call_operand.hbm [shape: bf16[8,128], index: 0, kind: input, shape index: {}]
  %s1 = inlined_call_operand.hbm [shape: bf16[128,128], index: 1, kind: input, shape index: {}]
  %s2 = inlined_call_operand.vmem [shape: f32[1,128], index: 2, kind: input, shape index: {}]
  %s3 = inlined_call_operand.hbm [shape: bf16[128,128], index: 3, kind: input, shape index: {}]
  %s4 = inlined_call_operand.vmem [shape: f32[1,128], index: 4, kind: input, shape index: {}]
  %s5 = inlined_call_operand.hbm [shape: f32[8,128], index: 5, kind: output, shape index: {}]
  %s6 = sld [smem:[#allocation0]]
  $region50: #{tpu_custom_call.1} parent=0
    _
  %s8 = ssub.s32 1, %s6
  %s9 = scalar_select 0, %s8, %s6
  $region1: #{tpu_custom_call.1} parent=0
    #allocation3 [shape = 'u8[2048]{0}', space=vmem, size = 0x800, scoped, tag = 'input window, operand 0, single buffered']
    #allocation4 [shape = 's32[1]{0}', space=sflag, size = 0x4, scoped, tag = 'scoped memory for tpu_custom_call.1']
    #allocation5 [shape = 's32[1]{0}', space=sflag, size = 0x4, scoped, tag = 'scoped memory for tpu_custom_call.1']
    #allocation6 [shape = 'u8[32768]{0}', space=vmem, size = 0x8000, scoped, tag = 'input window, operand 1, single buffered']
    #allocation7 [shape = 's32[1]{0}', space=sflag, size = 0x4, scoped, tag = 'scoped memory for tpu_custom_call.1']
    #allocation8 [shape = 'u8[32768]{0}', space=vmem, size = 0x8000, scoped, tag = 'input window, operand 3, single buffered']
    #allocation9 [shape = 'u8[4096]{0}', space=vmem, size = 0x1000, scoped, tag = 'output window, operand 0, single buffered']
    %10 = vsyncpa [#allocation4], 0
    %11 = vsyncpa [#allocation7], 0
    %12 = vsyncpa [#allocation5], 0
    // Predicated region
    $region2: #{tpu_custom_call.1} parent=1 // pred_check
      _
    $region3: #{tpu_custom_call.1} parent=1 // pred_check_branch
      %14 = sbr.rel (0) target = $region5
    $region4: #{tpu_custom_call.1} parent=1 // pred_region
      %s16 = ssub.s32 64, 64
      %17 = vsyncadd [#allocation4], %s16
      %s19 = sshll.u32 [#allocation3], 4
      %s20 = int_to_ptr.vmem [resolvable:$true] %s19
      %22 = dma.hbm_to_vmem [thread:$0]  %s0, 64, %s20, [#allocation4]
    $region5: #{tpu_custom_call.1} parent=1 // pred_fallthru
      _
    // Predicated region
    $region6: #{tpu_custom_call.1} parent=1 // pred_check
      _
    $region7: #{tpu_custom_call.1} parent=1 // pred_check_branch
      %24 = sbr.rel (0) target = $region9
    $region8: #{tpu_custom_call.1} parent=1 // pred_region
      %s26 = ssub.s32 1024, 1024
      %27 = vsyncadd [#allocation7], %s26
      %s28 = sshll.u32 [#allocation6], 4
      %s29 = int_to_ptr.vmem [resolvable:$true] %s28
      %34 = dma.hbm_to_vmem [thread:$0]  %s1, 1024, %s29, [#allocation7], 64, 64, 4
    $region9: #{tpu_custom_call.1} parent=1 // pred_fallthru
      _
    // Predicated region
    $region10: #{tpu_custom_call.1} parent=1 // pred_check
      _
    $region11: #{tpu_custom_call.1} parent=1 // pred_check_branch
      %36 = sbr.rel (0) target = $region13
    $region12: #{tpu_custom_call.1} parent=1 // pred_region
      _
    $region13: #{tpu_custom_call.1} parent=1 // pred_fallthru
      _
    // Predicated region
    $region14: #{tpu_custom_call.1} parent=1 // pred_check
      _
    $region15: #{tpu_custom_call.1} parent=1 // pred_check_branch
      %38 = sbr.rel (0) target = $region17
    $region16: #{tpu_custom_call.1} parent=1 // pred_region
      %s40 = ssub.s32 1024, 1024
      %41 = vsyncadd [#allocation7], %s40
      %s42 = sshll.u32 [#allocation8], 4
      %s43 = int_to_ptr.vmem [resolvable:$true] %s42
      %48 = dma.hbm_to_vmem [thread:$0]  %s3, 1024, %s43, [#allocation7], 64, 64, 4
    $region17: #{tpu_custom_call.1} parent=1 // pred_fallthru
      _
    // Predicated region
    $region18: #{tpu_custom_call.1} parent=1 // pred_check
      _
    $region19: #{tpu_custom_call.1} parent=1 // pred_check_branch
      %50 = sbr.rel (0) target = $region21
    $region20: #{tpu_custom_call.1} parent=1 // pred_region
      _
    $region21: #{tpu_custom_call.1} parent=1 // pred_fallthru
      _
    // Predicated region
    $region22: #{tpu_custom_call.1} parent=1 // pred_check
      _
    $region23: #{tpu_custom_call.1} parent=1 // pred_check_branch
      %52 = sbr.rel (0) target = $region25
    $region24: #{tpu_custom_call.1} parent=1 // pred_region
      %53 = dma.done [#allocation4], 64
    $region25: #{tpu_custom_call.1} parent=1 // pred_fallthru
      _
    // Predicated region
    $region26: #{tpu_custom_call.1} parent=1 // pred_check
      _
    $region27: #{tpu_custom_call.1} parent=1 // pred_check_branch
      %55 = sbr.rel (0) target = $region29
    $region28: #{tpu_custom_call.1} parent=1 // pred_region
      %56 = dma.done [#allocation7], 1024
    $region29: #{tpu_custom_call.1} parent=1 // pred_fallthru
      _
    // Predicated region
    $region30: #{tpu_custom_call.1} parent=1 // pred_check
      _
    $region31: #{tpu_custom_call.1} parent=1 // pred_check_branch
      %58 = sbr.rel (0) target = $region33
    $region32: #{tpu_custom_call.1} parent=1 // pred_region
      %59 = dma.done [#allocation7], 1024
    $region33: #{tpu_custom_call.1} parent=1 // pred_fallthru
      _
    %p61 = scmp.eq.s32.totalorder 0, 0
    // Predicated region
    $region34: #{tpu_custom_call.1} parent=1 // pred_check
      %p62 = pneg %p61
    $region35: #{tpu_custom_call.1} parent=1 // pred_check_branch
      %64 = sbr.rel (%p62) target = $region37
    $region36: #{tpu_custom_call.1} parent=1 // pred_region
      %65 = vst [vmem:[#allocation2] sm:$0xff] 0.0
    $region37: #{tpu_custom_call.1} parent=1 // pred_fallthru
      _
    %v66 = vld [vmem:[#allocation3] sm:$0xf]
    %v67 = vld [vmem:[#allocation2] sm:$0xff]
    %v68 = vld [vmem:[#allocation6] sm:$0xf]
    %v69 = vld [vmem:[#allocation6 + $0x4] sm:$0xf]
    %v70 = vld [vmem:[#allocation6 + $0x8] sm:$0xf]
    %v71 = vld [vmem:[#allocation6 + $0xc] sm:$0xf]
    %v72 = vld [vmem:[#allocation6 + $0x10] sm:$0xf]
    %v73 = vld [vmem:[#allocation6 + $0x14] sm:$0xf]
    %v74 = vld [vmem:[#allocation6 + $0x18] sm:$0xf]
    %v75 = vld [vmem:[#allocation6 + $0x1c] sm:$0xf]
    %v76 = vld [vmem:[#allocation6 + $0x20] sm:$0xf]
    %v77 = vld [vmem:[#allocation6 + $0x24] sm:$0xf]
    %v78 = vld [vmem:[#allocation6 + $0x28] sm:$0xf]
    %v79 = vld [vmem:[#allocation6 + $0x2c] sm:$0xf]
    %v80 = vld [vmem:[#allocation6 + $0x30] sm:$0xf]
    %v81 = vld [vmem:[#allocation6 + $0x34] sm:$0xf]
    %v82 = vld [vmem:[#allocation6 + $0x38] sm:$0xf]
    %v83 = vld [vmem:[#allocation6 + $0x3c] sm:$0xf]
    %v100 = vunpack.c.l.b16 %v68
    %v101 = vunpack.c.l.b16 %v69
    %v102 = vunpack.c.l.b16 %v70
    %v103 = vunpack.c.l.b16 %v71
    %v104 = vunpack.c.l.b16 %v72
    %v105 = vunpack.c.l.b16 %v73
    %v106 = vunpack.c.l.b16 %v74
    %v107 = vunpack.c.l.b16 %v75
    %v108 = vunpack.c.l.b16 %v76
    %v109 = vunpack.c.l.b16 %v77
    %v110 = vunpack.c.l.b16 %v78
    %v111 = vunpack.c.l.b16 %v79
    %v112 = vunpack.c.l.b16 %v80
    %v113 = vunpack.c.l.b16 %v81
    %v114 = vunpack.c.l.b16 %v82
    %v115 = vunpack.c.l.b16 %v83
    %v116 = vpack.c.b16 %v101, %v100
    %v117 = vpack.c.b16 %v103, %v102
    %v118 = vpack.c.b16 %v105, %v104
    %v119 = vpack.c.b16 %v107, %v106
    %v120 = vpack.c.b16 %v109, %v108
    %v121 = vpack.c.b16 %v111, %v110
    %v122 = vpack.c.b16 %v113, %v112
    %v123 = vpack.c.b16 %v115, %v114
    %132 = vmatprep.subr.bf16.mxu0 0
    %133 = vmatpush1.bf16.msra.mxu0 %v116
    %134 = vmatprep.subr.bf16.mxu0 0
    %135 = vmatpush1.bf16.msra.mxu0 %v117
    %136 = vmatprep.subr.bf16.mxu0 0
    %137 = vmatpush1.bf16.msra.mxu0 %v118
    %138 = vmatprep.subr.bf16.mxu0 0
    %139 = vmatpush1.bf16.msra.mxu0 %v119
    %140 = vmatprep.subr.bf16.mxu0 0
    %141 = vmatpush1.bf16.msra.mxu0 %v120
    %142 = vmatprep.subr.bf16.mxu0 0
    %143 = vmatpush1.bf16.msra.mxu0 %v121
    %144 = vmatprep.subr.bf16.mxu0 0
    %145 = vmatpush1.bf16.msra.mxu0 %v122
    %146 = vmatprep.subr.bf16.mxu0 0
    %147 = vmatpush1.bf16.msra.mxu0 %v123
    %148 = vmatprep.subr.bf16.mxu0 0
    %149 = vmatpush1.bf16.msra.mxu0 0
    %150 = vmatprep.subr.bf16.mxu0 0
    %151 = vmatpush1.bf16.msra.mxu0 0
    %152 = vmatprep.subr.bf16.mxu0 0
    %153 = vmatpush1.bf16.msra.mxu0 0
    %154 = vmatprep.subr.bf16.mxu0 0
    %155 = vmatpush1.bf16.msra.mxu0 0
    %156 = vmatprep.subr.bf16.mxu0 0
    %157 = vmatpush1.bf16.msra.mxu0 0
    %158 = vmatprep.subr.bf16.mxu0 0
    %159 = vmatpush1.bf16.msra.mxu0 0
    %160 = vmatprep.subr.bf16.mxu0 0
    %161 = vmatpush1.bf16.msra.mxu0 0
    %162 = vmatprep.subr.bf16.mxu0 0
    %163 = vmatpush1.bf16.msra.mxu0 0
    %164 = vmatprep.mubr.bf16.mxu0 0
    %165 = vmatmul.mubr.bf16.gmra.mrb[0].mxu0 %v66
    %v166 = vpop.f32.mrb[0].mxu0
    %v167 = vadd.f32 0.0, %v166
    %v168 = vpop.f32.mrb[0].mxu0
    %v169 = vpop.f32.mrb[0].mxu0
    %v170 = vpop.f32.mrb[0].mxu0
    %171 = vdwg.mxu0
    %v172 = vadd.f32 %v67, %v167
    %173 = vst [vmem:[#allocation2] sm:$0xff] %v172
    // Predicated region
    $region38: #{tpu_custom_call.1} parent=1 // pred_check
      %p174 = pneg %p61
    $region39: #{tpu_custom_call.1} parent=1 // pred_check_branch
      %176 = sbr.rel (%p174) target = $region41
    $region40: #{tpu_custom_call.1} parent=1 // pred_region
      %v177 = vld [vmem:[#allocation2] sm:$0xff]
      %v178 = vld [vmem:[%s2] sm:$0x1]
      %v180 = vlaneseq
      %v181 = vshrl.u32 %v180, 7
      %v182 = vsub.s32 0, %v181
      %v183 = vrot.slane %v178, %v182
      %v185 = vadd.f32 %v177, %v183
      %v186 = vmax.f32 %v185, 0.0
      %v187 = vpack.c.bf16 %v186, %v186
      %v188 = vld [vmem:[#allocation8] sm:$0xf]
      %v189 = vld [vmem:[#allocation8 + $0x4] sm:$0xf]
      %v190 = vld [vmem:[#allocation8 + $0x8] sm:$0xf]
      %v191 = vld [vmem:[#allocation8 + $0xc] sm:$0xf]
      %v192 = vld [vmem:[#allocation8 + $0x10] sm:$0xf]
      %v193 = vld [vmem:[#allocation8 + $0x14] sm:$0xf]
      %v194 = vld [vmem:[#allocation8 + $0x18] sm:$0xf]
      %v195 = vld [vmem:[#allocation8 + $0x1c] sm:$0xf]
      %v196 = vld [vmem:[#allocation8 + $0x20] sm:$0xf]
      %v197 = vld [vmem:[#allocation8 + $0x24] sm:$0xf]
      %v198 = vld [vmem:[#allocation8 + $0x28] sm:$0xf]
      %v199 = vld [vmem:[#allocation8 + $0x2c] sm:$0xf]
      %v200 = vld [vmem:[#allocation8 + $0x30] sm:$0xf]
      %v201 = vld [vmem:[#allocation8 + $0x34] sm:$0xf]
      %v202 = vld [vmem:[#allocation8 + $0x38] sm:$0xf]
      %v203 = vld [vmem:[#allocation8 + $0x3c] sm:$0xf]
      %v204 = vld [vmem:[%s4] sm:$0x1]
      %v206 = vlaneseq
      %v207 = vshrl.u32 %v206, 7
      %v208 = vsub.s32 0, %v207
      %v209 = vrot.slane %v204, %v208
      %v227 = vunpack.c.l.b16 %v188
      %v228 = vunpack.c.l.b16 %v189
      %v229 = vunpack.c.l.b16 %v190
      %v230 = vunpack.c.l.b16 %v191
      %v231 = vunpack.c.l.b16 %v192
      %v232 = vunpack.c.l.b16 %v193
      %v233 = vunpack.c.l.b16 %v194
      %v234 = vunpack.c.l.b16 %v195
      %v235 = vunpack.c.l.b16 %v196
      %v236 = vunpack.c.l.b16 %v197
      %v237 = vunpack.c.l.b16 %v198
      %v238 = vunpack.c.l.b16 %v199
      %v239 = vunpack.c.l.b16 %v200
      %v240 = vunpack.c.l.b16 %v201
      %v241 = vunpack.c.l.b16 %v202
      %v242 = vunpack.c.l.b16 %v203
      %v243 = vpack.c.b16 %v228, %v227
      %v244 = vpack.c.b16 %v230, %v229
      %v245 = vpack.c.b16 %v232, %v231
      %v246 = vpack.c.b16 %v234, %v233
      %v247 = vpack.c.b16 %v236, %v235
      %v248 = vpack.c.b16 %v238, %v237
      %v249 = vpack.c.b16 %v240, %v239
      %v250 = vpack.c.b16 %v242, %v241
      %259 = vmatprep.subr.bf16.mxu0 0
      %260 = vmatpush1.bf16.msra.mxu0 %v243
      %261 = vmatprep.subr.bf16.mxu0 0
      %262 = vmatpush1.bf16.msra.mxu0 %v244
      %263 = vmatprep.subr.bf16.mxu0 0
      %264 = vmatpush1.bf16.msra.mxu0 %v245
      %265 = vmatprep.subr.bf16.mxu0 0
      %266 = vmatpush1.bf16.msra.mxu0 %v246
      %267 = vmatprep.subr.bf16.mxu0 0
      %268 = vmatpush1.bf16.msra.mxu0 %v247
      %269 = vmatprep.subr.bf16.mxu0 0
      %270 = vmatpush1.bf16.msra.mxu0 %v248
      %271 = vmatprep.subr.bf16.mxu0 0
      %272 = vmatpush1.bf16.msra.mxu0 %v249
      %273 = vmatprep.subr.bf16.mxu0 0
      %274 = vmatpush1.bf16.msra.mxu0 %v250
      %275 = vmatprep.subr.bf16.mxu0 0
      %276 = vmatpush1.bf16.msra.mxu0 0
      %277 = vmatprep.subr.bf16.mxu0 0
      %278 = vmatpush1.bf16.msra.mxu0 0
      %279 = vmatprep.subr.bf16.mxu0 0
      %280 = vmatpush1.bf16.msra.mxu0 0
      %281 = vmatprep.subr.bf16.mxu0 0
      %282 = vmatpush1.bf16.msra.mxu0 0
      %283 = vmatprep.subr.bf16.mxu0 0
      %284 = vmatpush1.bf16.msra.mxu0 0
      %285 = vmatprep.subr.bf16.mxu0 0
      %286 = vmatpush1.bf16.msra.mxu0 0
      %287 = vmatprep.subr.bf16.mxu0 0
      %288 = vmatpush1.bf16.msra.mxu0 0
      %289 = vmatprep.subr.bf16.mxu0 0
      %290 = vmatpush1.bf16.msra.mxu0 0
      %291 = vmatprep.mubr.bf16.mxu0 0
      %292 = vmatmul.mubr.bf16.gmra.mrb[0].mxu0 %v187
      %v293 = vpop.f32.mrb[0].mxu0
      %v294 = vadd.f32 %v209, %v293
      %v295 = vpop.f32.mrb[0].mxu0
      %v296 = vpop.f32.mrb[0].mxu0
      %v297 = vpop.f32.mrb[0].mxu0
      %298 = vdwg.mxu0
      %299 = vmax.xlane.f32.xlu0 %v294
      %v300 = vpop.xlane.xlu0 %299
      %v301 = vsub.f32 %v294, %v300
      %v302 = vmul.f32 %v301, 1.442695
      %v303 = vpow.pop %v302
      %304 = vadd.xlane.f32.xlu0 %v303
      %v305 = vpop.xlane.xlu0 %304
      %v306 = vrcp.pop %v305
      %v307 = vmul.f32 %v303, %v306
      %308 = vst [vmem:[#allocation9] sm:$0xff] %v307
    $region41: #{tpu_custom_call.1} parent=1 // pred_fallthru
      _
    // Predicated region
    $region42: #{tpu_custom_call.1} parent=1 // pred_check
      _
    $region43: #{tpu_custom_call.1} parent=1 // pred_check_branch
      %310 = sbr.rel (0) target = $region45
    $region44: #{tpu_custom_call.1} parent=1 // pred_region
      %s312 = ssub.s32 128, 128
      %313 = vsyncadd [#allocation5], %s312
      %s315 = sshll.u32 [#allocation9], 4
      %s316 = int_to_ptr.vmem [resolvable:$true] %s315
      %318 = dma.vmem_to_hbm [thread:$0]  %s316, 128, %s5, [#allocation5]
    $region45: #{tpu_custom_call.1} parent=1 // pred_fallthru
      _
    // Predicated region
    $region46: #{tpu_custom_call.1} parent=1 // pred_check
      _
    $region47: #{tpu_custom_call.1} parent=1 // pred_check_branch
      %320 = sbr.rel (0) target = $region49
    $region48: #{tpu_custom_call.1} parent=1 // pred_region
      %321 = dma.done [#allocation5], 128
    $region49: #{tpu_custom_call.1} parent=1 // pred_fallthru
      _
    %322 = vsyncpa [#allocation4], 1
    %323 = vsyncpa [#allocation7], 1
    %324 = vsyncpa [#allocation5], 1

</llo_original>
